<compile_context>
chip_gen: v7x
topology: tpu7x:2x2x1
jax: 0.10.0
libtpu: 0.0.40
codegen_flags: <defaults>
</compile_context>

<pallas_src>
import jax
import jax.numpy as jnp
from jax.experimental import pallas as pl
from jax.experimental.pallas import tpu as pltpu


def _round_up(x, m):
    return (x + m - 1) // m * m


def _choose_tm(B, tm_max):
    """Batch tile size: multiple of 8 sublanes.

    For B > tm_max, pick TM so the number of grid steps is even (balanced
    2-TensorCore split on v7x under dimension_semantics=("parallel",)) while
    each tile still amortizes the per-grid-step pipeline overhead.
    """
    if B <= tm_max:
        return _round_up(B, 8)
    n = pl.cdiv(B, tm_max)
    if n % 2:
        n += 1  # even tile count -> no 2:1 imbalance across v7x's 2 TCs
    return _round_up(pl.cdiv(B, n), 8)


def critic_kernel(obs_ref, w1_ref, b1_ref, w2_ref, b2_ref, w3r_ref, b3_ref,
                  out_ref):
    # Weights arrive pre-cast (bf16 or f32); only the per-tile obs cast is
    # done here, since the obs tile is new every grid step.
    x = obs_ref[...].astype(w1_ref.dtype)          # (TM, obs_dim)

    # Layer 1: MXU matmul (f32 accumulate) + bias + tanh (EUP, f32).
    h1 = jnp.tanh(
        jnp.dot(x, w1_ref[...], preferred_element_type=jnp.float32)
        + b1_ref[...]
    )                                              # (TM, H) f32
    h1 = h1.astype(w2_ref.dtype)

    # Layer 2: MXU matmul (f32 accumulate) + bias + tanh.
    h2 = jnp.tanh(
        jnp.dot(h1, w2_ref[...], preferred_element_type=jnp.float32)
        + b2_ref[...]
    )                                              # (TM, H) f32

    # Layer 3 (H -> 1): VPU multiply + XLU lane reduce; b3 folded in from SMEM.
    v = jnp.sum(h2 * w3r_ref[...], axis=-1, keepdims=True) + b3_ref[0, 0]
    out_ref[...] = v.astype(out_ref.dtype)         # (TM, 1)


def critic_forward(obs, params, *, tm_max=1024, use_bf16=True):
    """obs: (B, obs_dim) float32. Returns (B,) float32 (matches .squeeze(-1))."""
    w1, b1, w2, b2, w3, b3 = params
    B, obs_dim = obs.shape
    H = w1.shape[1]

    TM = _choose_tm(B, tm_max)
    num_tiles = pl.cdiv(B, TM)  # ragged last tile handled by Pallas block clipping

    # Hoisted, one-time weight casts (weights stay VMEM-resident across steps).
    mm_dtype = jnp.bfloat16 if use_bf16 else jnp.float32
    w1c = w1.astype(mm_dtype)
    w2c = w2.astype(mm_dtype)
    w3_row = w3.reshape(1, H)   # f32: used on the VPU, never the MXU
    b3s = b3.reshape(1, 1)      # SMEM scalar

    def const2d(shape):
        return pl.BlockSpec(shape, lambda i: (0, 0))

    cost = pl.CostEstimate(
        flops=2 * B * (obs_dim * H + H * H + H),
        transcendentals=2 * B * H,
        bytes_accessed=B * obs_dim * 4 + B * 4
        + (obs_dim * H + H * H + H) * 2 + (3 * H + 1) * 4,
    )

    out = pl.pallas_call(
        critic_kernel,
        out_shape=jax.ShapeDtypeStruct((B, 1), jnp.float32),
        grid=(num_tiles,),
        in_specs=[
            pl.BlockSpec((TM, obs_dim), lambda i: (i, 0)),  # obs tile (pipelined)
            const2d((obs_dim, H)),                          # w1 (resident, mm dtype)
            const2d((1, H)),                                # b1 (f32)
            const2d((H, H)),                                # w2 (resident, mm dtype)
            const2d((1, H)),                                # b2 (f32)
            const2d((1, H)),                                # w3 as (1, H) row (f32)
            pl.BlockSpec(memory_space=pltpu.MemorySpace.SMEM),  # b3 scalar
        ],
        out_specs=pl.BlockSpec((TM, 1), lambda i: (i, 0)),
        compiler_params=pltpu.CompilerParams(
            dimension_semantics=("parallel",),  # shard batch tiles over TCs (v7x)
        ),
        cost_estimate=cost,
    )(obs, w1c, b1, w2c, b2, w3_row, b3s)
    return out[:, 0]  # squeeze(-1); writeback already clipped to B rows


def init_params(key, obs_dim, hidden_dim=64):
    """Deterministic synthetic init (uniform +/- 1/sqrt(fan_in), like PyTorch default).

    Weights are stored as (in_features, out_features), i.e. transposed relative
    to nn.Linear's (out, in), so the kernel can do plain `x @ W + b` on the MXU.
    """
    ks = jax.random.split(key, 6)

    def lin(kw, kb, fan_in, fan_out):
        bound = 1.0 / jnp.sqrt(fan_in)
        w = jax.random.uniform(kw, (fan_in, fan_out), jnp.float32, -bound, bound)
        b = jax.random.uniform(kb, (1, fan_out), jnp.float32, -bound, bound)
        return w, b

    w1, b1 = lin(ks[0], ks[1], obs_dim, hidden_dim)
    w2, b2 = lin(ks[2], ks[3], hidden_dim, hidden_dim)
    w3, b3 = lin(ks[4], ks[5], hidden_dim, 1)
    return (w1, b1, w2, b2, w3, b3)


def critic_reference(obs, params):
    w1, b1, w2, b2, w3, b3 = params
    h1 = jnp.tanh(obs @ w1 + b1)
    h2 = jnp.tanh(h1 @ w2 + b2)
    return (h2 @ w3 + b3)[:, 0]


if __name__ == "__main__":
    OBS_DIM, HIDDEN = 32, 64
    key = jax.random.PRNGKey(0)
    k_obs1, k_obs2, k_params = jax.random.split(key, 3)
    params = init_params(k_params, OBS_DIM, HIDDEN)

    # Case 1: tiny batch, exact f32 path -> tight tolerance vs. reference.
    obs_small = jax.random.normal(k_obs1, (8, OBS_DIM), jnp.float32)
    v_f32 = critic_forward(obs_small, params, use_bf16=False)
    jax.block_until_ready(v_f32)
    ref_small = critic_reference(obs_small, params)
    assert v_f32.shape == (8,), v_f32.shape
    assert jnp.allclose(v_f32, ref_small, atol=1e-5, rtol=1e-5), "f32 path mismatch"

    # Case 1b: same batch through the default bf16-MXU path (relaxed tolerance).
    v_bf16 = critic_forward(obs_small, params)  # use_bf16=True default
    jax.block_until_ready(v_bf16)
    assert jnp.allclose(v_bf16, ref_small, atol=2e-2, rtol=2e-2), "bf16 path mismatch"

    # Case 2: batch NOT a multiple of the tile size (exercises the grid,
    # pipelining, even-tile-count TM choice, and ragged-tail block clipping).
    obs_big = jax.random.normal(k_obs2, (300, OBS_DIM), jnp.float32)
    v_big = critic_forward(obs_big, params, tm_max=128)
    jax.block_until_ready(v_big)
    ref_big = critic_reference(obs_big, params)
    assert v_big.shape == (300,), v_big.shape
    assert jnp.all(jnp.isfinite(v_big)), "non-finite values in valid rows"
    assert jnp.allclose(v_big, ref_big, atol=2e-2, rtol=2e-2), "ragged-batch mismatch"

    print("KERNEL_OK")
</pallas_src>

<mosaic_0001>
module attributes {stable_mosaic.version = 11 : i64} {
  func.func @critic_kernel(%arg0: i32, %arg1: memref<8x32xf32, #tpu.memory_space<vmem>>, %arg2: memref<32x64xf32, #tpu.memory_space<vmem>>, %arg3: memref<1x64xf32, #tpu.memory_space<vmem>>, %arg4: memref<64x64xf32, #tpu.memory_space<vmem>>, %arg5: memref<1x64xf32, #tpu.memory_space<vmem>>, %arg6: memref<1x64xf32, #tpu.memory_space<vmem>>, %arg7: memref<1x1xf32, #tpu.memory_space<smem>>, %arg8: memref<8x1xf32, #tpu.memory_space<vmem>>) attributes {dimension_semantics = [#tpu.dimension_semantics<parallel>], iteration_bounds = array<i64: 1>, scalar_prefetch = 0 : i64, scratch_operands = 0 : i64, tpu.core_type = #tpu.core_type<tc>, window_params = [{transform_indices = @transform_0, window_bounds = array<i64: 8, 32>}, {pipeline_mode = #tpu.pipeline_mode<synchronous>, transform_indices = @transform_1, window_bounds = array<i64: 32, 64>}, {pipeline_mode = #tpu.pipeline_mode<synchronous>, transform_indices = @transform_2, window_bounds = array<i64: 1, 64>}, {pipeline_mode = #tpu.pipeline_mode<synchronous>, transform_indices = @transform_3, window_bounds = array<i64: 64, 64>}, {pipeline_mode = #tpu.pipeline_mode<synchronous>, transform_indices = @transform_4, window_bounds = array<i64: 1, 64>}, {pipeline_mode = #tpu.pipeline_mode<synchronous>, transform_indices = @transform_5, window_bounds = array<i64: 1, 64>}, {transform_indices = @transform_6, window_bounds = array<i64: 1, 1>}, {transform_indices = @transform_7, window_bounds = array<i64: 8, 1>}]} {
    %c0 = arith.constant 0 : index
    %c0_0 = arith.constant 0 : index
    %0 = vector.load %arg1[%c0, %c0_0] : memref<8x32xf32, #tpu.memory_space<vmem>>, vector<8x32xf32>
    %c0_1 = arith.constant 0 : index
    %c0_2 = arith.constant 0 : index
    %1 = vector.load %arg2[%c0_1, %c0_2] : memref<32x64xf32, #tpu.memory_space<vmem>>, vector<32x64xf32>
    %cst = arith.constant dense<0.000000e+00> : vector<8x64xf32>
    %2 = tpu.matmul %0, %1, %cst {dimension_numbers = #tpu.dot_dimension_numbers<[1], [0], [0], [1], [0, 0, 1, 1], [], []>} : vector<8x32xf32>, vector<32x64xf32>, vector<8x64xf32> -> vector<8x64xf32>
    %c0_3 = arith.constant 0 : index
    %c0_4 = arith.constant 0 : index
    %3 = vector.load %arg3[%c0_3, %c0_4] : memref<1x64xf32, #tpu.memory_space<vmem>>, vector<1x64xf32>
    %4 = vector.broadcast %3 : vector<1x64xf32> to vector<8x64xf32>
    %5 = arith.addf %2, %4 : vector<8x64xf32>
    %6 = math.tanh %5 : vector<8x64xf32>
    %c0_5 = arith.constant 0 : index
    %c0_6 = arith.constant 0 : index
    %7 = vector.load %arg4[%c0_5, %c0_6] : memref<64x64xf32, #tpu.memory_space<vmem>>, vector<64x64xf32>
    %cst_7 = arith.constant dense<0.000000e+00> : vector<8x64xf32>
    %8 = tpu.matmul %6, %7, %cst_7 {dimension_numbers = #tpu.dot_dimension_numbers<[1], [0], [0], [1], [0, 0, 1, 1], [], []>} : vector<8x64xf32>, vector<64x64xf32>, vector<8x64xf32> -> vector<8x64xf32>
    %c0_8 = arith.constant 0 : index
    %c0_9 = arith.constant 0 : index
    %9 = vector.load %arg5[%c0_8, %c0_9] : memref<1x64xf32, #tpu.memory_space<vmem>>, vector<1x64xf32>
    %10 = vector.broadcast %9 : vector<1x64xf32> to vector<8x64xf32>
    %11 = arith.addf %8, %10 : vector<8x64xf32>
    %12 = math.tanh %11 : vector<8x64xf32>
    %c0_10 = arith.constant 0 : index
    %c0_11 = arith.constant 0 : index
    %13 = vector.load %arg6[%c0_10, %c0_11] : memref<1x64xf32, #tpu.memory_space<vmem>>, vector<1x64xf32>
    %14 = vector.broadcast %13 : vector<1x64xf32> to vector<8x64xf32>
    %15 = arith.mulf %12, %14 : vector<8x64xf32>
    %cst_12 = arith.constant dense<0.000000e+00> : vector<8xf32>
    %16 = vector.multi_reduction <add>, %15, %cst_12 [1] : vector<8x64xf32> to vector<8xf32>
    %17 = vector.shape_cast %16 : vector<8xf32> to vector<8x1xf32>
    %c0_13 = arith.constant 0 : index
    %c0_14 = arith.constant 0 : index
    %18 = memref.load %arg7[%c0_13, %c0_14] : memref<1x1xf32, #tpu.memory_space<smem>>
    %19 = vector.broadcast %18 : f32 to vector<8x1xf32>
    %20 = arith.addf %17, %19 : vector<8x1xf32>
    %c0_15 = arith.constant 0 : index
    %c0_16 = arith.constant 0 : index
    %21 = vector.load %arg8[%c0_15, %c0_16] : memref<8x1xf32, #tpu.memory_space<vmem>>, vector<8x1xf32>
    tpu.vector_store %arg8[%c0_15, %c0_16], %20 {strides = array<i32>} : memref<8x1xf32, #tpu.memory_space<vmem>>, vector<8x1xf32>,
    return
  }
  func.func @transform_0(%arg0: i32) -> (i32, i32) {
    %c0_i32 = arith.constant 0 : i32
    %c0_i32_0 = arith.constant 0 : i32
    return %arg0, %c0_i32 : i32, i32
  }
  func.func @transform_1(%arg0: i32) -> (i32, i32) {
    %c0_i32 = arith.constant 0 : i32
    %c0_i32_0 = arith.constant 0 : i32
    %c0_i32_1 = arith.constant 0 : i32
    return %c0_i32, %c0_i32_0 : i32, i32
  }
  func.func @transform_2(%arg0: i32) -> (i32, i32) {
    %c0_i32 = arith.constant 0 : i32
    %c0_i32_0 = arith.constant 0 : i32
    %c0_i32_1 = arith.constant 0 : i32
    return %c0_i32, %c0_i32_0 : i32, i32
  }
  func.func @transform_3(%arg0: i32) -> (i32, i32) {
    %c0_i32 = arith.constant 0 : i32
    %c0_i32_0 = arith.constant 0 : i32
    %c0_i32_1 = arith.constant 0 : i32
    return %c0_i32, %c0_i32_0 : i32, i32
  }
  func.func @transform_4(%arg0: i32) -> (i32, i32) {
    %c0_i32 = arith.constant 0 : i32
    %c0_i32_0 = arith.constant 0 : i32
    %c0_i32_1 = arith.constant 0 : i32
    return %c0_i32, %c0_i32_0 : i32, i32
  }
  func.func @transform_5(%arg0: i32) -> (i32, i32) {
    %c0_i32 = arith.constant 0 : i32
    %c0_i32_0 = arith.constant 0 : i32
    %c0_i32_1 = arith.constant 0 : i32
    return %c0_i32, %c0_i32_0 : i32, i32
  }
  func.func @transform_6(%arg0: i32) -> (i32, i32) {
    %c0_i32 = arith.constant 0 : i32
    %c0_i32_0 = arith.constant 0 : i32
    %c0_i32_1 = arith.constant 0 : i32
    return %c0_i32, %c0_i32_0 : i32, i32
  }
  func.func @transform_7(%arg0: i32) -> (i32, i32) {
    %c0_i32 = arith.constant 0 : i32
    %c0_i32_0 = arith.constant 0 : i32
    return %arg0, %c0_i32 : i32, i32
  }
}

</mosaic_0001>

<llo_original>
// kernel: tpu_custom_call.1
$region0: #{tpu_custom_call.1}
  #allocation0 [shape = 'u32[]', space=smem, size = 0x4, offset = 0x4, fixed_abs, tag = 'smem constant byte address 0x4 - core index']
  #allocation1 [shape = 'u32[144,128]{1,0:T(1,128)}', space=vmem, size = 0x12000, scoped, tag = 'internal scratch']
  #allocation2 [shape = 'f32[1,1]{1,0:T(1,128)S(6)}', space=smem, size = 0x200, scoped, tag = 'scoped memory for tpu_custom_call.1']
  %s0 = inlined_call_operand.hbm [shape: f32[8,32], index: 0, kind: input, shape index: {}]
  %s1 = inlined_call_operand.hbm [shape: f32[32,64], index: 1, kind: input, shape index: {}]
  %s2 = inlined_call_operand.vmem [shape: f32[1,64], index: 2, kind: input, shape index: {}]
  %s3 = inlined_call_operand.hbm [shape: f32[64,64], index: 3, kind: input, shape index: {}]
  %s4 = inlined_call_operand.vmem [shape: f32[1,64], index: 4, kind: input, shape index: {}]
  %s5 = inlined_call_operand.vmem [shape: f32[1,64], index: 5, kind: input, shape index: {}]
  %s6 = inlined_call_operand.<no memory space> [shape: f32[1,1], index: 6, kind: input, shape index: {}]
  %s7 = inlined_call_operand.vmem [shape: f32[8,1], index: 7, kind: output, shape index: {}]
  %s8 = sld [smem:[#allocation0]]
  $region50: #{tpu_custom_call.1} parent=0
    _
  %s10 = ssub.s32 1, %s8
  %s11 = scalar_select 0, %s10, %s8
  %12 = sst [smem:[#allocation2]] %s6
  $region1: #{tpu_custom_call.1} parent=0
    #allocation3 [shape = 'u8[4096]{0}', space=vmem, size = 0x1000, scoped, tag = 'input window, operand 0, single buffered']
    #allocation4 [shape = 's32[1]{0}', space=sflag, size = 0x4, scoped, tag = 'scoped memory for tpu_custom_call.1']
    #allocation5 [shape = 'u8[16384]{0}', space=vmem, size = 0x4000, scoped, tag = 'input window, operand 1, single buffered']
    #allocation6 [shape = 's32[1]{0}', space=sflag, size = 0x4, scoped, tag = 'scoped memory for tpu_custom_call.1']
    #allocation7 [shape = 'u8[32768]{0}', space=vmem, size = 0x8000, scoped, tag = 'input window, operand 3, single buffered']
    %13 = vsyncpa [#allocation4], 0
    %14 = vsyncpa [#allocation6], 0
    // Predicated region
    $region2: #{tpu_custom_call.1} parent=1 // pred_check
      _
    $region3: #{tpu_custom_call.1} parent=1 // pred_check_branch
      %16 = sbr.rel (0) target = $region5
    $region4: #{tpu_custom_call.1} parent=1 // pred_region
      %s18 = ssub.s32 128, 128
      %19 = vsyncadd [#allocation4], %s18
      %s21 = sshll.u32 [#allocation3], 4
      %s22 = int_to_ptr.vmem [resolvable:$true] %s21
      %24 = dma.hbm_to_vmem [thread:$0]  %s0, 128, %s22, [#allocation4]
    $region5: #{tpu_custom_call.1} parent=1 // pred_fallthru
      _
    // Predicated region
    $region6: #{tpu_custom_call.1} parent=1 // pred_check
      _
    $region7: #{tpu_custom_call.1} parent=1 // pred_check_branch
      %26 = sbr.rel (0) target = $region9
    $region8: #{tpu_custom_call.1} parent=1 // pred_region
      %s28 = ssub.s32 512, 512
      %29 = vsyncadd [#allocation6], %s28
      %s30 = sshll.u32 [#allocation5], 4
      %s31 = int_to_ptr.vmem [resolvable:$true] %s30
      %36 = dma.hbm_to_vmem [thread:$0]  %s1, 512, %s31, [#allocation6], 128, 128, 8
    $region9: #{tpu_custom_call.1} parent=1 // pred_fallthru
      _
    // Predicated region
    $region10: #{tpu_custom_call.1} parent=1 // pred_check
      _
    $region11: #{tpu_custom_call.1} parent=1 // pred_check_branch
      %38 = sbr.rel (0) target = $region13
    $region12: #{tpu_custom_call.1} parent=1 // pred_region
      _
    $region13: #{tpu_custom_call.1} parent=1 // pred_fallthru
      _
    // Predicated region
    $region14: #{tpu_custom_call.1} parent=1 // pred_check
      _
    $region15: #{tpu_custom_call.1} parent=1 // pred_check_branch
      %40 = sbr.rel (0) target = $region17
    $region16: #{tpu_custom_call.1} parent=1 // pred_region
      %s42 = ssub.s32 1024, 1024
      %43 = vsyncadd [#allocation6], %s42
      %s44 = sshll.u32 [#allocation7], 4
      %s45 = int_to_ptr.vmem [resolvable:$true] %s44
      %50 = dma.hbm_to_vmem [thread:$0]  %s3, 1024, %s45, [#allocation6], 128, 128, 8
    $region17: #{tpu_custom_call.1} parent=1 // pred_fallthru
      _
    // Predicated region
    $region18: #{tpu_custom_call.1} parent=1 // pred_check
      _
    $region19: #{tpu_custom_call.1} parent=1 // pred_check_branch
      %52 = sbr.rel (0) target = $region21
    $region20: #{tpu_custom_call.1} parent=1 // pred_region
      _
    $region21: #{tpu_custom_call.1} parent=1 // pred_fallthru
      _
    // Predicated region
    $region22: #{tpu_custom_call.1} parent=1 // pred_check
      _
    $region23: #{tpu_custom_call.1} parent=1 // pred_check_branch
      %54 = sbr.rel (0) target = $region25
    $region24: #{tpu_custom_call.1} parent=1 // pred_region
      _
    $region25: #{tpu_custom_call.1} parent=1 // pred_fallthru
      _
    // Predicated region
    $region26: #{tpu_custom_call.1} parent=1 // pred_check
      _
    $region27: #{tpu_custom_call.1} parent=1 // pred_check_branch
      %56 = sbr.rel (0) target = $region29
    $region28: #{tpu_custom_call.1} parent=1 // pred_region
      _
    $region29: #{tpu_custom_call.1} parent=1 // pred_fallthru
      _
    // Predicated region
    $region30: #{tpu_custom_call.1} parent=1 // pred_check
      _
    $region31: #{tpu_custom_call.1} parent=1 // pred_check_branch
      %58 = sbr.rel (0) target = $region33
    $region32: #{tpu_custom_call.1} parent=1 // pred_region
      %59 = dma.done [#allocation4], 128
    $region33: #{tpu_custom_call.1} parent=1 // pred_fallthru
      _
    // Predicated region
    $region34: #{tpu_custom_call.1} parent=1 // pred_check
      _
    $region35: #{tpu_custom_call.1} parent=1 // pred_check_branch
      %61 = sbr.rel (0) target = $region37
    $region36: #{tpu_custom_call.1} parent=1 // pred_region
      %62 = dma.done [#allocation6], 512
    $region37: #{tpu_custom_call.1} parent=1 // pred_fallthru
      _
    // Predicated region
    $region38: #{tpu_custom_call.1} parent=1 // pred_check
      _
    $region39: #{tpu_custom_call.1} parent=1 // pred_check_branch
      %64 = sbr.rel (0) target = $region41
    $region40: #{tpu_custom_call.1} parent=1 // pred_region
      %65 = dma.done [#allocation6], 1024
    $region41: #{tpu_custom_call.1} parent=1 // pred_fallthru
      _
    %v66 = vld [vmem:[#allocation3] sm:$0xff]
    %v67 = vld [vmem:[#allocation5] sm:$0xff]
    %v68 = vld [vmem:[#allocation5 + $0x8] sm:$0xff]
    %v69 = vld [vmem:[#allocation5 + $0x10] sm:$0xff]
    %v70 = vld [vmem:[#allocation5 + $0x18] sm:$0xff]
    %v71 = vld [vmem:[%s2] sm:$0x1]
    %v73 = vlaneseq
    %v74 = vshrl.u32 %v73, 7
    %v75 = vsub.s32 0, %v74
    %v76 = vrot.slane %v71, %v75
    %vm78 = vcmask 261120
    %v80 = vsel %vm78, %v66, 0
    %82 = vmatprep.subr.mxu0 0.0
    %83 = vmatpush1.msra.mxu0 %v67
    %84 = vmatprep.subr.mxu0 0.0
    %85 = vmatpush1.msra.mxu0 %v68
    %86 = vmatprep.subr.mxu0 0.0
    %87 = vmatpush1.msra.mxu0 %v69
    %88 = vmatprep.subr.mxu0 0.0
    %89 = vmatpush1.msra.mxu0 %v70
    %90 = vmatprep.subr.mxu0 0.0
    %91 = vmatpush1.msra.mxu0 0.0
    %92 = vmatprep.subr.mxu0 0.0
    %93 = vmatpush1.msra.mxu0 0.0
    %94 = vmatprep.subr.mxu0 0.0
    %95 = vmatpush1.msra.mxu0 0.0
    %96 = vmatprep.subr.mxu0 0.0
    %97 = vmatpush1.msra.mxu0 0.0
    %98 = vmatprep.subr.mxu0 0.0
    %99 = vmatpush1.msra.mxu0 0.0
    %100 = vmatprep.subr.mxu0 0.0
    %101 = vmatpush1.msra.mxu0 0.0
    %102 = vmatprep.subr.mxu0 0.0
    %103 = vmatpush1.msra.mxu0 0.0
    %104 = vmatprep.subr.mxu0 0.0
    %105 = vmatpush1.msra.mxu0 0.0
    %106 = vmatprep.subr.mxu0 0.0
    %107 = vmatpush1.msra.mxu0 0.0
    %108 = vmatprep.subr.mxu0 0.0
    %109 = vmatpush1.msra.mxu0 0.0
    %110 = vmatprep.subr.mxu0 0.0
    %111 = vmatpush1.msra.mxu0 0.0
    %112 = vmatprep.subr.mxu0 0.0
    %113 = vmatpush1.msra.mxu0 0.0
    %114 = vmatprep.subr.mxu0 0.0
    %115 = vmatpush1.msra.mxu0 0.0
    %116 = vmatprep.subr.mxu0 0.0
    %117 = vmatpush1.msra.mxu0 0.0
    %118 = vmatprep.subr.mxu0 0.0
    %119 = vmatpush1.msra.mxu0 0.0
    %120 = vmatprep.subr.mxu0 0.0
    %121 = vmatpush1.msra.mxu0 0.0
    %122 = vmatprep.subr.mxu0 0.0
    %123 = vmatpush1.msra.mxu0 0.0
    %124 = vmatprep.subr.mxu0 0.0
    %125 = vmatpush1.msra.mxu0 0.0
    %126 = vmatprep.subr.mxu0 0.0
    %127 = vmatpush1.msra.mxu0 0.0
    %128 = vmatprep.subr.mxu0 0.0
    %129 = vmatpush1.msra.mxu0 0.0
    %130 = vmatprep.subr.mxu0 0.0
    %131 = vmatpush1.msra.mxu0 0.0
    %132 = vmatprep.subr.mxu0 0.0
    %133 = vmatpush1.msra.mxu0 0.0
    %134 = vmatprep.subr.mxu0 0.0
    %135 = vmatpush1.msra.mxu0 0.0
    %136 = vmatprep.subr.mxu0 0.0
    %137 = vmatpush1.msra.mxu0 0.0
    %138 = vmatprep.subr.mxu0 0.0
    %139 = vmatpush1.msra.mxu0 0.0
    %140 = vmatprep.subr.mxu0 0.0
    %141 = vmatpush1.msra.mxu0 0.0
    %142 = vmatprep.subr.mxu0 0.0
    %143 = vmatpush1.msra.mxu0 0.0
    %144 = vmatprep.subr.mxu0 0.0
    %145 = vmatpush1.msra.mxu0 0.0
    %146 = vmatprep.mubr.f32.mxu0 0.0
    %147 = vmatmul.mubr.f32.gmra.mrb[0].mxu0 %v80
    %v148 = vpop.f32.mrb[0].mxu0
    %v149 = vadd.f32 %v76, %v148
    %v150 = vpop.f32.mrb[0].mxu0
    %151 = vdwg.mxu0
    %v152 = vtanh.pop %v149
    %v153 = vld [vmem:[#allocation7] sm:$0xff]
    %v154 = vld [vmem:[#allocation7 + $0x8] sm:$0xff]
    %v155 = vld [vmem:[#allocation7 + $0x10] sm:$0xff]
    %v156 = vld [vmem:[#allocation7 + $0x18] sm:$0xff]
    %v157 = vld [vmem:[#allocation7 + $0x20] sm:$0xff]
    %v158 = vld [vmem:[#allocation7 + $0x28] sm:$0xff]
    %v159 = vld [vmem:[#allocation7 + $0x30] sm:$0xff]
    %v160 = vld [vmem:[#allocation7 + $0x38] sm:$0xff]
    %v161 = vld [vmem:[%s4] sm:$0x1]
    %v163 = vlaneseq
    %v164 = vshrl.u32 %v163, 7
    %v165 = vsub.s32 0, %v164
    %v166 = vrot.slane %v161, %v165
    %vm168 = vcmask 523264
    %v170 = vsel %vm168, %v152, 0
    %172 = vmatprep.subr.mxu0 0.0
    %173 = vmatpush1.msra.mxu0 %v153
    %174 = vmatprep.subr.mxu0 0.0
    %175 = vmatpush1.msra.mxu0 %v154
    %176 = vmatprep.subr.mxu0 0.0
    %177 = vmatpush1.msra.mxu0 %v155
    %178 = vmatprep.subr.mxu0 0.0
    %179 = vmatpush1.msra.mxu0 %v156
    %180 = vmatprep.subr.mxu0 0.0
    %181 = vmatpush1.msra.mxu0 %v157
    %182 = vmatprep.subr.mxu0 0.0
    %183 = vmatpush1.msra.mxu0 %v158
    %184 = vmatprep.subr.mxu0 0.0
    %185 = vmatpush1.msra.mxu0 %v159
    %186 = vmatprep.subr.mxu0 0.0
    %187 = vmatpush1.msra.mxu0 %v160
    %188 = vmatprep.subr.mxu0 0.0
    %189 = vmatpush1.msra.mxu0 0.0
    %190 = vmatprep.subr.mxu0 0.0
    %191 = vmatpush1.msra.mxu0 0.0
    %192 = vmatprep.subr.mxu0 0.0
    %193 = vmatpush1.msra.mxu0 0.0
    %194 = vmatprep.subr.mxu0 0.0
    %195 = vmatpush1.msra.mxu0 0.0
    %196 = vmatprep.subr.mxu0 0.0
    %197 = vmatpush1.msra.mxu0 0.0
    %198 = vmatprep.subr.mxu0 0.0
    %199 = vmatpush1.msra.mxu0 0.0
    %200 = vmatprep.subr.mxu0 0.0
    %201 = vmatpush1.msra.mxu0 0.0
    %202 = vmatprep.subr.mxu0 0.0
    %203 = vmatpush1.msra.mxu0 0.0
    %204 = vmatprep.subr.mxu0 0.0
    %205 = vmatpush1.msra.mxu0 0.0
    %206 = vmatprep.subr.mxu0 0.0
    %207 = vmatpush1.msra.mxu0 0.0
    %208 = vmatprep.subr.mxu0 0.0
    %209 = vmatpush1.msra.mxu0 0.0
    %210 = vmatprep.subr.mxu0 0.0
    %211 = vmatpush1.msra.mxu0 0.0
    %212 = vmatprep.subr.mxu0 0.0
    %213 = vmatpush1.msra.mxu0 0.0
    %214 = vmatprep.subr.mxu0 0.0
    %215 = vmatpush1.msra.mxu0 0.0
    %216 = vmatprep.subr.mxu0 0.0
    %217 = vmatpush1.msra.mxu0 0.0
    %218 = vmatprep.subr.mxu0 0.0
    %219 = vmatpush1.msra.mxu0 0.0
    %220 = vmatprep.subr.mxu0 0.0
    %221 = vmatpush1.msra.mxu0 0.0
    %222 = vmatprep.subr.mxu0 0.0
    %223 = vmatpush1.msra.mxu0 0.0
    %224 = vmatprep.subr.mxu0 0.0
    %225 = vmatpush1.msra.mxu0 0.0
    %226 = vmatprep.subr.mxu0 0.0
    %227 = vmatpush1.msra.mxu0 0.0
    %228 = vmatprep.subr.mxu0 0.0
    %229 = vmatpush1.msra.mxu0 0.0
    %230 = vmatprep.subr.mxu0 0.0
    %231 = vmatpush1.msra.mxu0 0.0
    %232 = vmatprep.subr.mxu0 0.0
    %233 = vmatpush1.msra.mxu0 0.0
    %234 = vmatprep.subr.mxu0 0.0
    %235 = vmatpush1.msra.mxu0 0.0
    %236 = vmatprep.mubr.f32.mxu0 0.0
    %237 = vmatmul.mubr.f32.gmra.mrb[0].mxu0 %v170
    %v238 = vpop.f32.mrb[0].mxu0
    %v239 = vadd.f32 %v166, %v238
    %v240 = vpop.f32.mrb[0].mxu0
    %241 = vdwg.mxu0
    %v242 = vtanh.pop %v239
    %v243 = vld [vmem:[%s5] sm:$0x1]
    %v245 = vlaneseq
    %v246 = vshrl.u32 %v245, 7
    %v247 = vsub.s32 0, %v246
    %v248 = vrot.slane %v243, %v247
    %v250 = vmul.f32 %v242, %v248
    %v251 = vsel %vm168, %v250, 0.0
    %252 = vadd.xlane.f32.xlu0 %v251
    %v253 = vpop.xlane.xlu0 %252
    %s254 = sld [smem:[#allocation2]]
    %v255 = vstv %s254
    %v256 = vadd.f32 %v253, %v255
    %vm257 = vcmask 7168
    %258 = vst.msk [vmem:[%s7] sm:$0xff] %vm257, %v256
    // Predicated region
    $region42: #{tpu_custom_call.1} parent=1 // pred_check
      _
    $region43: #{tpu_custom_call.1} parent=1 // pred_check_branch
      %260 = sbr.rel (0) target = $region45
    $region44: #{tpu_custom_call.1} parent=1 // pred_region
      _
    $region45: #{tpu_custom_call.1} parent=1 // pred_fallthru
      _
    // Predicated region
    $region46: #{tpu_custom_call.1} parent=1 // pred_check
      _
    $region47: #{tpu_custom_call.1} parent=1 // pred_check_branch
      %262 = sbr.rel (0) target = $region49
    $region48: #{tpu_custom_call.1} parent=1 // pred_region
      _
    $region49: #{tpu_custom_call.1} parent=1 // pred_fallthru
      _
    %263 = vsyncpa [#allocation4], 1
    %264 = vsyncpa [#allocation6], 1

</llo_original>
